<compile_context>
chip_gen: v7x
topology: tpu7x:2x2x1
jax: 0.10.0
libtpu: 0.0.40
codegen_flags: <defaults>
</compile_context>

<pallas_src>
import math

import jax
import jax.numpy as jnp
from jax.experimental import pallas as pl
from jax.experimental.pallas import tpu as pltpu


_LANES = 128
_TARGET_TILE_BYTES = 4 * 1024 * 1024   # per x-tile target; total VMEM stays < 32 MiB


def _pick_rows(total_rows: int, bytes_per_row: int) -> int:
    """Largest row tile (multiple of 8, or the full extent) within the byte target."""
    if total_rows * bytes_per_row <= _TARGET_TILE_BYTES:
        return int(total_rows)
    rows = max(8, (_TARGET_TILE_BYTES // bytes_per_row) // 8 * 8)
    return int(min(rows, total_rows))


def _add_pe_kernel(pe_ref, x_ref, o_ref):
    # pe_ref block: (tR, C)  -- reused across the (inner) batch grid axis.
    # x_ref / o_ref blocks: (1, tR, C).
    o_ref[0] = (x_ref[0].astype(jnp.float32) + pe_ref[...]).astype(o_ref.dtype)


def _launch(pe2d: jax.Array, x3d: jax.Array, tile_rows: int, cost) -> jax.Array:
    B, R, C = x3d.shape
    return pl.pallas_call(
        _add_pe_kernel,
        out_shape=jax.ShapeDtypeStruct((B, R, C), x3d.dtype),
        grid=(pl.cdiv(R, tile_rows), B),                       # batch innermost
        in_specs=[
            pl.BlockSpec((tile_rows, C), lambda r, b: (r, 0)),      # PE tile
            pl.BlockSpec((1, tile_rows, C), lambda r, b: (b, r, 0)),
        ],
        out_specs=pl.BlockSpec((1, tile_rows, C), lambda r, b: (b, r, 0)),
        compiler_params=pltpu.CompilerParams(
            dimension_semantics=("parallel", "parallel"),
        ),
        cost_estimate=cost,
    )(pe2d, x3d)


def _compute_position_encoding(seq_length: int, emb_dim: int) -> jax.Array:
    """Same math as the PyTorch module's _compute_pos_encoding (f32 table)."""
    if emb_dim % 2 != 0:
        raise ValueError(
            "Cannot use sin/cos positional encoding with odd dim (got dim={:d})".format(emb_dim)
        )
    position = jnp.arange(seq_length, dtype=jnp.float32)[:, None]          # (S, 1)
    div_term = jnp.exp(
        jnp.arange(0, emb_dim, 2, dtype=jnp.float32) * (-math.log(10000.0) / emb_dim)
    )                                                                      # (D/2,)
    angles = position * div_term                                           # (S, D/2)
    # interleave: pe[:, 0::2] = sin, pe[:, 1::2] = cos
    return jnp.stack([jnp.sin(angles), jnp.cos(angles)], axis=-1).reshape(seq_length, emb_dim)


def position_encoding_forward(x: jax.Array, seq_length: int | None = None) -> jax.Array:
    """x: [B, S, D] -> x + sinusoidal position encoding (matches module forward)."""
    B, S, D = x.shape
    s_pe = S if seq_length is None else seq_length
    if s_pe != S:
        # The torch add would also require matching lengths to broadcast.
        raise ValueError("seq_length must match input sequence length for the add")

    pe = _compute_position_encoding(S, D)                                  # (S, D) f32
    itemsize = jnp.dtype(x.dtype).itemsize
    cost = pl.CostEstimate(
        flops=B * S * D,
        transcendentals=0,                       # table built once outside the kernel
        bytes_accessed=2 * B * S * D * itemsize + S * D * 4,
    )

    if D % _LANES == 0:
        # Already lane-dense in the natural layout.
        tile_rows = _pick_rows(S, D * itemsize)
        return _launch(pe, x, tile_rows, cost)

    if (S * D) % _LANES == 0:
        # Lane-dense flat view: element order is identical, so the add commutes
        # with the reshape; stores use full 128-lane vregs.
        R = (S * D) // _LANES
        x3 = x.reshape(B, R, _LANES)
        pe2 = pe.reshape(R, _LANES)
        tile_rows = _pick_rows(R, _LANES * itemsize)
        out = _launch(pe2, x3, tile_rows, cost)
        return out.reshape(B, S, D)

    # Fallback: D < 128 and S*D not a multiple of 128 -> masked partial stores,
    # still correct.
    tile_rows = _pick_rows(S, D * itemsize)
    return _launch(pe, x, tile_rows, cost)


def _reference_pos_encoding(x: jax.Array) -> jax.Array:
    """Pure-JAX reference mirroring the PyTorch module."""
    B, S, D = x.shape
    position = jnp.arange(S, dtype=jnp.float32)[:, None]
    div_term = jnp.exp(jnp.arange(0, D, 2, dtype=jnp.float32) * -(math.log(10000.0) / D))
    pe = jnp.zeros((S, D), dtype=jnp.float32)
    pe = pe.at[:, 0::2].set(jnp.sin(position * div_term))
    pe = pe.at[:, 1::2].set(jnp.cos(position * div_term))
    return x + pe[None, :, :]


if __name__ == "__main__":
    k1, k2, k3 = jax.random.split(jax.random.PRNGKey(0), 3)

    # Module-implied small shapes: batch=2, context_length=8, emb_dim=32.
    B, S, D = 2, 8, 32
    x = jax.random.normal(k1, (B, S, D), dtype=jnp.float32)
    out = jax.block_until_ready(position_encoding_forward(x))
    ref = _reference_pos_encoding(x)
    assert out.shape == (B, S, D)
    assert jnp.allclose(out, ref, atol=1e-5, rtol=1e-5)

    # Regular path (D multiple of 128, lane-dense without reshape).
    x2 = jax.random.normal(k2, (2, 8, 128), dtype=jnp.float32)
    out2 = jax.block_until_ready(position_encoding_forward(x2))
    assert jnp.allclose(out2, _reference_pos_encoding(x2), atol=1e-5, rtol=1e-5)

    # Fallback path (S*D not a multiple of 128 -> masked stores, still correct).
    x3 = jax.random.normal(k3, (2, 5, 24), dtype=jnp.float32)
    out3 = jax.block_until_ready(position_encoding_forward(x3))
    assert jnp.allclose(out3, _reference_pos_encoding(x3), atol=1e-5, rtol=1e-5)

    print("KERNEL_OK")
</pallas_src>

<mosaic_0001>
module attributes {stable_mosaic.version = 11 : i64} {
  func.func @_add_pe_kernel(%arg0: i32, %arg1: i32, %arg2: memref<2x128xf32, #tpu.memory_space<vmem>>, %arg3: memref<1x2x128xf32, #tpu.memory_space<vmem>>, %arg4: memref<1x2x128xf32, #tpu.memory_space<vmem>>) attributes {dimension_semantics = [#tpu.dimension_semantics<parallel>, #tpu.dimension_semantics<parallel>], iteration_bounds = array<i64: 1, 2>, scalar_prefetch = 0 : i64, scratch_operands = 0 : i64, tpu.core_type = #tpu.core_type<tc>, window_params = [{transform_indices = @transform_0, window_bounds = array<i64: 2, 128>}, {transform_indices = @transform_1, window_bounds = array<i64: 1, 2, 128>}, {transform_indices = @transform_2, window_bounds = array<i64: 1, 2, 128>}]} {
    %c0 = arith.constant 0 : index
    %c0_0 = arith.constant 0 : index
    %c0_1 = arith.constant 0 : index
    %0 = vector.load %arg3[%c0, %c0_0, %c0_1] : memref<1x2x128xf32, #tpu.memory_space<vmem>>, vector<1x2x128xf32>
    %1 = vector.shape_cast %0 : vector<1x2x128xf32> to vector<2x128xf32>
    %c0_2 = arith.constant 0 : index
    %c0_3 = arith.constant 0 : index
    %2 = vector.load %arg2[%c0_2, %c0_3] : memref<2x128xf32, #tpu.memory_space<vmem>>, vector<2x128xf32>
    %3 = arith.addf %1, %2 : vector<2x128xf32>
    %c0_4 = arith.constant 0 : index
    %c0_5 = arith.constant 0 : index
    %c0_6 = arith.constant 0 : index
    %4 = vector.load %arg4[%c0_4, %c0_5, %c0_6] : memref<1x2x128xf32, #tpu.memory_space<vmem>>, vector<1x2x128xf32>
    %5 = vector.shape_cast %4 : vector<1x2x128xf32> to vector<2x128xf32>
    %6 = vector.shape_cast %3 : vector<2x128xf32> to vector<1x2x128xf32>
    tpu.vector_store %arg4[%c0_4, %c0_5, %c0_6], %6 {strides = array<i32>} : memref<1x2x128xf32, #tpu.memory_space<vmem>>, vector<1x2x128xf32>,
    return
  }
  func.func @transform_0(%arg0: i32, %arg1: i32) -> (i32, i32) {
    %c0_i32 = arith.constant 0 : i32
    %c0_i32_0 = arith.constant 0 : i32
    return %arg0, %c0_i32 : i32, i32
  }
  func.func @transform_1(%arg0: i32, %arg1: i32) -> (i32, i32, i32) {
    %c0_i32 = arith.constant 0 : i32
    %c0_i32_0 = arith.constant 0 : i32
    return %arg1, %arg0, %c0_i32 : i32, i32, i32
  }
  func.func @transform_2(%arg0: i32, %arg1: i32) -> (i32, i32, i32) {
    %c0_i32 = arith.constant 0 : i32
    %c0_i32_0 = arith.constant 0 : i32
    return %arg1, %arg0, %c0_i32 : i32, i32, i32
  }
}

</mosaic_0001>

<llo_original>
// kernel: tpu_custom_call.1
$region0: #{tpu_custom_call.1}
  #allocation0 [shape = 'u32[]', space=smem, size = 0x4, offset = 0x4, fixed_abs, tag = 'smem constant byte address 0x4 - core index']
  #allocation1 [shape = 'u32[144,128]{1,0:T(1,128)}', space=vmem, size = 0x12000, scoped, tag = 'internal scratch']
  %s0 = inlined_call_operand.hbm [shape: f32[2,128], index: 0, kind: input, shape index: {}]
  %s1 = inlined_call_operand.hbm [shape: f32[2,2,128], index: 1, kind: input, shape index: {}]
  %s2 = inlined_call_operand.hbm [shape: f32[2,2,128], index: 2, kind: output, shape index: {}]
  %s3 = sld [smem:[#allocation0]]
  $region49: #{tpu_custom_call.1} parent=0
    _
  %s5 = ssub.s32 1, %s3
  %s6 = scalar_select 0, %s5, %s3
  $region1: #{tpu_custom_call.1} parent=0
    #allocation2 [shape = 'u8[1024]{0}', space=vmem, size = 0x400, scoped, tag = 'input window, operand 0, single buffered']
    #allocation3 [shape = 's32[2]{0}', space=sflag, size = 0x8, scoped, tag = 'scoped memory for tpu_custom_call.1']
    #allocation4 [shape = 's32[2]{0}', space=sflag, size = 0x8, scoped, tag = 'scoped memory for tpu_custom_call.1']
    #allocation5 [shape = 'u8[2048]{0}', space=vmem, size = 0x800, scoped, tag = 'input window, operand 1']
    #allocation6 [shape = 's32[2]{0}', space=sflag, size = 0x8, scoped, tag = 'scoped memory for tpu_custom_call.1']
    #allocation7 [shape = 'u8[2048]{0}', space=vmem, size = 0x800, scoped, tag = 'output window, operand 0']
    %7 = vsyncpa [#allocation3], 0
    %8 = vsyncpa [#allocation6], 0
    %s9 = scalar_lea.sflag [#allocation6], 1
    %10 = vsyncpa %s9, 0
    %11 = vsyncpa [#allocation4], 0
    %s12 = scalar_lea.sflag [#allocation4], 1
    %13 = vsyncpa %s12, 0
    loop: start=0, step=1, limit=4
    $region2: #{tpu_custom_call.1} parent=1 // loop_pre_header
      _
    $region3: #{tpu_custom_call.1} parent=1 // loop_header
      %s15 = sphi 0, %s19
      %p16 = scmp.ge.s32.totalorder %s15, 4
      %s22 = sphi 0, %s34
      %s23 = sphi 0, %s30
      %s24 = sphi 0, %s22
      %s25 = sphi 0, %s23
      %s26 = sphi 0, %s24
      %s27 = sphi 0, %s25
      %s37 = sphi 0, %s39
      %s40 = sphi 0, %s37
      %s41 = sphi 0, %s40
      %s57 = sphi 0, %s41
      %s65 = sphi 0, %s67
      %s68 = sphi 0, %s65
      %s69 = sphi 0, %s68
      %s85 = sphi 0, %s69
      %s93 = sphi 0, %s95
      %s96 = sphi 0, %s93
      %s97 = sphi 0, %s96
      %s113 = sphi 0, %s97
    $region4: #{tpu_custom_call.1} parent=1 // loop_header_branch
      %18 = sbr.rel (%p16) target = $region8
    $region5: #{tpu_custom_call.1} parent=1 // loop_body
      %s20 = ssub.s32 %s15, 1
      %s21 = ssub.s32 %s15, 2
      %s28 = sadd.s32 1, %s23
      %p29 = scmp.ge.s32.totalorder %s28, 2
      %s30 = scalar_select %p29, 0, %s28
      %s31 = sadd.s32 1, %s22
      %s32 = scalar_select %p29, %s31, %s22
      %p33 = scmp.ge.s32.totalorder %s32, 1
      %s34 = scalar_select %p33, 0, %s32
      %s35 = ssub.s32 %s22, %s34
      %p36 = scmp.eq.s32.totalorder %s35, 0
      %s38 = sadd.s32 %s37, 1
      %s39 = scalar_select %p36, %s37, %s38
      %p42 = pneg %p36
      %p43 = scmp.eq.s32.totalorder %s15, 1
      %p44 = por %p42, %p43
      %p45 = scmp.ne.s32.totalorder %s37, %s40
      %p46 = scmp.eq.s32.totalorder %s15, 0
      %p47 = por %p45, %p46
      %p48 = scmp.ne.s32.totalorder %s37, %s40
      %p49 = scmp.eq.s32.totalorder %s20, 1
      %p50 = por %p48, %p49
      %p51 = scmp.ne.s32.totalorder %s40, %s41
      %p52 = scmp.eq.s32.totalorder %s20, 0
      %p53 = por %p51, %p52
      %p54 = scmp.ne.s32.totalorder %s40, %s41
      %p55 = scmp.eq.s32.totalorder %s21, 1
      %p56 = por %p54, %p55
      %p58 = scmp.ne.s32.totalorder %s41, %s57
      %p59 = scmp.eq.s32.totalorder %s21, 0
      %p60 = por %p58, %p59
      %s61 = ssub.s32 %s23, %s30
      %s62 = ssub.s32 %s22, %s34
      %s63 = sor.u32 %s61, %s62
      %p64 = scmp.eq.s32.totalorder %s63, 0
      %s66 = sadd.s32 %s65, 1
      %s67 = scalar_select %p64, %s65, %s66
      %p70 = pneg %p64
      %p71 = scmp.eq.s32.totalorder %s15, 1
      %p72 = por %p70, %p71
      %p73 = scmp.ne.s32.totalorder %s65, %s68
      %p74 = scmp.eq.s32.totalorder %s15, 0
      %p75 = por %p73, %p74
      %p76 = scmp.ne.s32.totalorder %s65, %s68
      %p77 = scmp.eq.s32.totalorder %s20, 1
      %p78 = por %p76, %p77
      %p79 = scmp.ne.s32.totalorder %s68, %s69
      %p80 = scmp.eq.s32.totalorder %s20, 0
      %p81 = por %p79, %p80
      %p82 = scmp.ne.s32.totalorder %s68, %s69
      %p83 = scmp.eq.s32.totalorder %s21, 1
      %p84 = por %p82, %p83
      %p86 = scmp.ne.s32.totalorder %s69, %s85
      %p87 = scmp.eq.s32.totalorder %s21, 0
      %p88 = por %p86, %p87
      %s89 = ssub.s32 %s23, %s30
      %s90 = ssub.s32 %s22, %s34
      %s91 = sor.u32 %s89, %s90
      %p92 = scmp.eq.s32.totalorder %s91, 0
      %s94 = sadd.s32 %s93, 1
      %s95 = scalar_select %p92, %s93, %s94
      %p98 = pneg %p92
      %p99 = scmp.eq.s32.totalorder %s15, 1
      %p100 = por %p98, %p99
      %p101 = scmp.ne.s32.totalorder %s93, %s96
      %p102 = scmp.eq.s32.totalorder %s15, 0
      %p103 = por %p101, %p102
      %p104 = scmp.ne.s32.totalorder %s93, %s96
      %p105 = scmp.eq.s32.totalorder %s20, 1
      %p106 = por %p104, %p105
      %p107 = scmp.ne.s32.totalorder %s96, %s97
      %p108 = scmp.eq.s32.totalorder %s20, 0
      %p109 = por %p107, %p108
      %p110 = scmp.ne.s32.totalorder %s96, %s97
      %p111 = scmp.eq.s32.totalorder %s21, 1
      %p112 = por %p110, %p111
      %p114 = scmp.ne.s32.totalorder %s97, %s113
      %p115 = scmp.eq.s32.totalorder %s21, 0
      %p116 = por %p114, %p115
      %p117 = scmp.le.s32.totalorder 1, %s15
      %p118 = scmp.lt.s32.totalorder %s15, 3
      %p119 = pnand %p117, %p118
      %p120 = pneg %p119
      // Predicated region
      $region9: #{tpu_custom_call.1} parent=5 // pred_check
        _
      $region10: #{tpu_custom_call.1} parent=5 // pred_check_branch
        %122 = sbr.rel (%p119) target = $region12
      $region11: #{tpu_custom_call.1} parent=5 // pred_region
        %s123 = ssub.s32 %s15, 1
        // Predicated region
        $region13: #{tpu_custom_call.1} parent=11 // pred_check
          %p124 = pneg %p53
        $region14: #{tpu_custom_call.1} parent=11 // pred_check_branch
          %126 = sbr.rel (%p124) target = $region16
        $region15: #{tpu_custom_call.1} parent=11 // pred_region
          %s128 = ssub.s32 32, 32
          %129 = vsyncadd [#allocation3], %s128
          %s130 = smul.addr %s24, 32
          %s131 = scalar_lea.hbm %s0, %s130
          %s133 = sshll.u32 [#allocation2], 4
          %s134 = int_to_ptr.vmem [resolvable:$true] %s133
          %136 = dma.hbm_to_vmem [thread:$0]  %s131, 32, %s134, [#allocation3]
        $region16: #{tpu_custom_call.1} parent=11 // pred_fallthru
          _
      $region12: #{tpu_custom_call.1} parent=5 // pred_fallthru
        _
      %p137 = scmp.lt.s32.totalorder %s15, 2
      // Predicated region
      $region17: #{tpu_custom_call.1} parent=5 // pred_check
        %p138 = pneg %p137
      $region18: #{tpu_custom_call.1} parent=5 // pred_check_branch
        %140 = sbr.rel (%p138) target = $region20
      $region19: #{tpu_custom_call.1} parent=5 // pred_region
        // Predicated region
        $region21: #{tpu_custom_call.1} parent=19 // pred_check
          %p141 = pneg %p75
        $region22: #{tpu_custom_call.1} parent=19 // pred_check_branch
          %143 = sbr.rel (%p141) target = $region24
        $region23: #{tpu_custom_call.1} parent=19 // pred_region
          %s144 = sand.u32 %s65, 1
          %s145 = scalar_lea.sflag [#allocation6], %s144
          %s146 = sand.u32 %s65, 1
          %s147 = smul.addr %s146, 2
          %s148 = scalar_lea.vmem [#allocation5], %s147
          %s150 = ssub.s32 32, 32
          %151 = vsyncadd %s145, %s150
          %s152 = sadd.s32 %s22, %s23
          %s153 = smul.addr %s152, 32
          %s154 = scalar_lea.hbm %s1, %s153
          %s156 = sshll.u32 %s148, 4
          %s157 = int_to_ptr.vmem [resolvable:$true] %s156
          %159 = dma.hbm_to_vmem [thread:$0]  %s154, 32, %s157, %s145
        $region24: #{tpu_custom_call.1} parent=19 // pred_fallthru
          _
      $region20: #{tpu_custom_call.1} parent=5 // pred_fallthru
        _
      %p160 = scmp.le.s32.totalorder 1, %s15
      %p161 = scmp.lt.s32.totalorder %s15, 3
      %p162 = pnand %p160, %p161
      %p163 = pneg %p162
      // Predicated region
      $region25: #{tpu_custom_call.1} parent=5 // pred_check
        _
      $region26: #{tpu_custom_call.1} parent=5 // pred_check_branch
        %165 = sbr.rel (%p162) target = $region28
      $region27: #{tpu_custom_call.1} parent=5 // pred_region
        %s166 = ssub.s32 %s15, 1
        // Predicated region
        $region29: #{tpu_custom_call.1} parent=27 // pred_check
          %p167 = pneg %p53
        $region30: #{tpu_custom_call.1} parent=27 // pred_check_branch
          %169 = sbr.rel (%p167) target = $region32
        $region31: #{tpu_custom_call.1} parent=27 // pred_region
          %170 = dma.done [#allocation3], 32
        $region32: #{tpu_custom_call.1} parent=27 // pred_fallthru
          _
        %s171 = sand.u32 %s68, 1
        %s172 = scalar_lea.sflag [#allocation6], %s171
        %s173 = sand.u32 %s68, 1
        %s174 = smul.addr %s173, 2
        %s175 = scalar_lea.vmem [#allocation5], %s174
        // Predicated region
        $region33: #{tpu_custom_call.1} parent=27 // pred_check
          %p176 = pneg %p81
        $region34: #{tpu_custom_call.1} parent=27 // pred_check_branch
          %178 = sbr.rel (%p176) target = $region36
        $region35: #{tpu_custom_call.1} parent=27 // pred_region
          %179 = dma.done %s172, 32
        $region36: #{tpu_custom_call.1} parent=27 // pred_fallthru
          _
        %p180 = pneg %p53
        %p181 = pneg %p50
        %s182 = sand.u32 %s68, 1
        %s183 = scalar_lea.sflag [#allocation6], %s182
        %s184 = sand.u32 %s68, 1
        %s185 = smul.addr %s184, 2
        %s186 = scalar_lea.vmem [#allocation5], %s185
        %p187 = pneg %p81
        %p188 = pneg %p78
        %p189 = pneg %p109
        %p190 = pneg %p106
        %s191 = sand.u32 %s96, 1
        %s192 = scalar_lea.sflag [#allocation4], %s191
        %s193 = sand.u32 %s96, 1
        %s194 = smul.addr %s193, 2
        %s195 = scalar_lea.vmem [#allocation7], %s194
        %v196 = vld [vmem:[%s175] sm:$0x3]
        %v197 = vld [vmem:[#allocation2] sm:$0x3]
        %v198 = vadd.f32 %v196, %v197
        %199 = vst [vmem:[%s195] sm:$0x3] %v198
        %s200 = sand.u32 %s96, 1
        %s201 = scalar_lea.sflag [#allocation4], %s200
        %s202 = sand.u32 %s96, 1
        %s203 = smul.addr %s202, 2
        %s204 = scalar_lea.vmem [#allocation7], %s203
        // Predicated region
        $region37: #{tpu_custom_call.1} parent=27 // pred_check
          %p205 = pneg %p106
        $region38: #{tpu_custom_call.1} parent=27 // pred_check_branch
          %207 = sbr.rel (%p205) target = $region40
        $region39: #{tpu_custom_call.1} parent=27 // pred_region
          %s209 = ssub.s32 32, 32
          %210 = vsyncadd %s201, %s209
          %s211 = sadd.s32 %s24, %s25
          %s212 = smul.addr %s211, 32
          %s213 = scalar_lea.hbm %s2, %s212
          %s215 = sshll.u32 %s204, 4
          %s216 = int_to_ptr.vmem [resolvable:$true] %s215
          %218 = dma.vmem_to_hbm [thread:$0]  %s216, 32, %s213, %s201
        $region40: #{tpu_custom_call.1} parent=27 // pred_fallthru
          _
      $region28: #{tpu_custom_call.1} parent=5 // pred_fallthru
        _
      %p219 = scmp.le.s32.totalorder 2, %s15
      // Predicated region
      $region41: #{tpu_custom_call.1} parent=5 // pred_check
        %p220 = pneg %p219
      $region42: #{tpu_custom_call.1} parent=5 // pred_check_branch
        %222 = sbr.rel (%p220) target = $region44
      $region43: #{tpu_custom_call.1} parent=5 // pred_region
        %s223 = ssub.s32 %s15, 2
        // Predicated region
        $region45: #{tpu_custom_call.1} parent=43 // pred_check
          %p224 = pneg %p112
        $region46: #{tpu_custom_call.1} parent=43 // pred_check_branch
          %226 = sbr.rel (%p224) target = $region48
        $region47: #{tpu_custom_call.1} parent=43 // pred_region
          %s227 = sand.u32 %s97, 1
          %s228 = scalar_lea.sflag [#allocation4], %s227
          %s229 = sand.u32 %s97, 1
          %s230 = smul.addr %s229, 2
          %s231 = scalar_lea.vmem [#allocation7], %s230
          %232 = dma.done %s228, 32
        $region48: #{tpu_custom_call.1} parent=43 // pred_fallthru
          _
      $region44: #{tpu_custom_call.1} parent=5 // pred_fallthru
        _
    $region6: #{tpu_custom_call.1} parent=1 // loop_footer
      %s19 = sadd.s32 1, %s15
    $region7: #{tpu_custom_call.1} parent=1 // loop_footer_branch
      %14 = sbr.rel target = $region3
    $region8: #{tpu_custom_call.1} parent=1 // loop_exit
      _
    %233 = vsyncpa [#allocation3], 1
    %s234 = scalar_lea.sflag [#allocation3], 1
    %235 = vsyncpa %s234, 1
    %236 = vsyncpa [#allocation6], 1
    %s237 = scalar_lea.sflag [#allocation6], 1
    %238 = vsyncpa %s237, 1
    %239 = vsyncpa [#allocation4], 1
    %s240 = scalar_lea.sflag [#allocation4], 1
    %241 = vsyncpa %s240, 1

</llo_original>
